<compile_context>
chip_gen: v7x
topology: tpu7x:2x2x1
jax: 0.10.0
libtpu: 0.0.40
codegen_flags: <defaults>
</compile_context>

<pallas_src>
import functools

import jax
import jax.numpy as jnp
from jax.experimental import pallas as pl
from jax.experimental.pallas import tpu as pltpu


_LANE = 128
# ~512K elements per x tile (~2 MiB of f32): measured f32 streaming is ~85-86%
# of HBM roofline at 1-4 MiB tiles, while 2x-buffered in+out tiles plus f32
# temporaries stay far below the scoped-VMEM limit on every generation.
_TARGET_TILE_ELEMS = 512 * 1024
# Covers 2 bufs x (in + out tile) + f32 temporaries + resident scale/bias with
# slack; <= defaults on v6e/v7x (and v7x's 64 MiB physical), raises v5e's 16 MiB.
_VMEM_LIMIT_BYTES = 32 * 1024 * 1024
# Keep scale/bias fully VMEM-resident only while their padded footprint is tiny
# (a (R,1) f32 column occupies ~R/8 * 4 KiB of VMEM because of lane padding).
_RESIDENT_MAX_ROWS = 2048


def _sublane(dtype) -> int:
    """Native sublane multiple for a dtype (sub-32-bit rows pack along sublanes)."""
    return {4: 8, 2: 16, 1: 32}.get(jnp.dtype(dtype).itemsize, 8)


def _cdiv(a: int, b: int) -> int:
    return -(-a // b)


def _pick_blocks(rows: int, cols: int, sublane: int,
                 target_elems: int = _TARGET_TILE_ELEMS) -> tuple[int, int]:
    """Pick (blk_rows, blk_cols): legal TPU block dims, ~target_elems per tile."""
    if cols * min(rows, sublane) <= target_elems:
        # Full-width rows fit comfortably: keep the block lane-dense end to end.
        blk_cols = cols
        blk_rows = min(rows, max(sublane, target_elems // cols))
        if blk_rows < rows:
            # Not the full extent -> must be a multiple of the sublane count.
            blk_rows = max(sublane, (blk_rows // sublane) * sublane)
    else:
        # One sublane-group of rows already reaches the target: block the columns
        # too (multiples of 128 lanes) so a wide row can never blow VMEM.
        blk_rows = min(rows, sublane)
        blk_cols = min(cols, max(_LANE, ((target_elems // blk_rows) // _LANE) * _LANE))

    # If everything would land in a single block, split the rows so both v7x
    # TensorCores get work (no effect on correctness; harmless on v5e/v6e).
    if _cdiv(rows, blk_rows) * _cdiv(cols, blk_cols) == 1 and rows >= 2 * sublane:
        half = _cdiv(rows, 2)
        half = max(sublane, _cdiv(half, sublane) * sublane)
        if half < rows:
            blk_rows = half
    return blk_rows, blk_cols


def _normalize_kernel_blocked(x_ref, scale_ref, bias_ref, o_ref):
    """Generic tile kernel: scale/bias block is (blk_rows, 1) or (1, blk_cols)."""
    x = x_ref[...].astype(jnp.float32)
    o_ref[...] = (x * scale_ref[...] + bias_ref[...]).astype(o_ref.dtype)


def _normalize_kernel_resident_rows(x_ref, scale_ref, bias_ref, o_ref, *, blk_rows):
    """scale/bias are whole (rows_pad, 1) columns resident in VMEM; slice our rows."""
    i = pl.program_id(0)
    start = pl.multiple_of(i * blk_rows, blk_rows)
    s = scale_ref[pl.ds(start, blk_rows), :]
    b = bias_ref[pl.ds(start, blk_rows), :]
    x = x_ref[...].astype(jnp.float32)
    o_ref[...] = (x * s + b).astype(o_ref.dtype)


def normalize_layer(x: jax.Array, means, sds) -> jax.Array:
    """(x - means[c]) / sds[c] broadcast over NCHW, matching NormalizeLayer.forward."""
    n, c, h, w = x.shape
    dtype = x.dtype
    itemsize = jnp.dtype(dtype).itemsize
    sublane = _sublane(dtype)
    hw = h * w

    # Fold the divide: y = x * (1/sd) + (-mean/sd). Compute constants in f32.
    scale_c = 1.0 / jnp.asarray(sds, jnp.float32)
    bias_c = -jnp.asarray(means, jnp.float32) * scale_c

    if hw % _LANE == 0:
        layout_a = True          # one (batch, channel) pair per row
        rows, cols = n * c, hw
    else:
        layout_a = False         # one image per row; channel varies along lanes
        rows, cols = n, c * hw
    x2 = x.reshape(rows, cols)

    blk_rows, blk_cols = _pick_blocks(rows, cols, sublane)
    grid = (pl.cdiv(rows, blk_rows), pl.cdiv(cols, blk_cols))

    if layout_a:
        scale_per_row = jnp.tile(scale_c, n)       # (rows,)
        bias_per_row = jnp.tile(bias_c, n)
        rows_pad = grid[0] * blk_rows
        use_resident = grid[0] > 1 and rows_pad <= _RESIDENT_MAX_ROWS
        if use_resident:
            # Whole padded column resident across the grid (constant block index);
            # padding uses scale=1 / bias=0 so masked edge rows stay finite.
            scale_arr = jnp.ones((rows_pad, 1), jnp.float32).at[:rows, 0].set(scale_per_row)
            bias_arr = jnp.zeros((rows_pad, 1), jnp.float32).at[:rows, 0].set(bias_per_row)
            sb_spec = pl.BlockSpec((rows_pad, 1), lambda i, j: (0, 0))
            kernel = functools.partial(_normalize_kernel_resident_rows, blk_rows=blk_rows)
        else:
            # Either a single row block (fetched once anyway) or rows too large to
            # keep resident: fetch a (blk_rows, 1) column when the row block changes.
            scale_arr = scale_per_row.reshape(rows, 1)
            bias_arr = bias_per_row.reshape(rows, 1)
            sb_spec = pl.BlockSpec((blk_rows, 1), lambda i, j: (i, 0))
            kernel = _normalize_kernel_blocked
    else:
        # Per-lane constants: channel repeats every H*W positions along the row.
        scale_arr = jnp.repeat(scale_c, hw).reshape(1, cols)
        bias_arr = jnp.repeat(bias_c, hw).reshape(1, cols)
        sb_spec = pl.BlockSpec((1, blk_cols), lambda i, j: (0, j))
        kernel = _normalize_kernel_blocked

    cost = pl.CostEstimate(
        flops=2 * rows * cols,
        transcendentals=0,
        bytes_accessed=2 * rows * cols * itemsize + 8 * max(rows, cols),
    )

    out2 = pl.pallas_call(
        kernel,
        out_shape=jax.ShapeDtypeStruct((rows, cols), dtype),
        grid=grid,
        in_specs=[
            pl.BlockSpec((blk_rows, blk_cols), lambda i, j: (i, j)),  # x tile
            sb_spec,                                                  # scale
            sb_spec,                                                  # bias
        ],
        out_specs=pl.BlockSpec((blk_rows, blk_cols), lambda i, j: (i, j)),
        compiler_params=pltpu.CompilerParams(
            dimension_semantics=("parallel", "parallel"),
            vmem_limit_bytes=_VMEM_LIMIT_BYTES,
        ),
        cost_estimate=cost,
    )(x2, scale_arr, bias_arr)

    return out2.reshape(n, c, h, w)


if __name__ == "__main__":
    key = jax.random.PRNGKey(0)
    k1, k2 = jax.random.split(key)

    # Lane-friendly case (H*W % 128 == 0): layout A, per-row constants.
    N, C, H, W = 2, 4, 16, 16
    x = jax.random.normal(k1, (N, C, H, W), dtype=jnp.float32)
    means = jnp.array([0.1, 0.2, 0.3, 0.4], dtype=jnp.float32)
    sds = jnp.array([0.5, 0.6, 0.7, 0.8], dtype=jnp.float32)

    out = normalize_layer(x, means, sds)
    jax.block_until_ready(out)
    ref = (x - means[None, :, None, None]) / sds[None, :, None, None]
    assert out.shape == (N, C, H, W)
    assert jnp.allclose(out, ref, atol=1e-5, rtol=1e-5)

    # Lane-unfriendly spatial size (14*14 = 196): exercises the layout-B path.
    N2, C2, H2, W2 = 2, 3, 14, 14
    x_b = jax.random.normal(k2, (N2, C2, H2, W2), dtype=jnp.float32)
    means_b = jnp.array([0.485, 0.456, 0.406], dtype=jnp.float32)
    sds_b = jnp.array([0.229, 0.224, 0.225], dtype=jnp.float32)

    out_b = normalize_layer(x_b, means_b, sds_b)
    jax.block_until_ready(out_b)
    ref_b = (x_b - means_b[None, :, None, None]) / sds_b[None, :, None, None]
    assert out_b.shape == (N2, C2, H2, W2)
    assert jnp.allclose(out_b, ref_b, atol=1e-5, rtol=1e-5)

    print("KERNEL_OK")
</pallas_src>

<mosaic_0001>
module attributes {stable_mosaic.version = 11 : i64} {
  func.func @_normalize_kernel_blocked(%arg0: i32, %arg1: i32, %arg2: memref<8x256xf32, #tpu.memory_space<vmem>>, %arg3: memref<8x1xf32, #tpu.memory_space<vmem>>, %arg4: memref<8x1xf32, #tpu.memory_space<vmem>>, %arg5: memref<8x256xf32, #tpu.memory_space<vmem>>) attributes {dimension_semantics = [#tpu.dimension_semantics<parallel>, #tpu.dimension_semantics<parallel>], iteration_bounds = array<i64: 1, 1>, scalar_prefetch = 0 : i64, scratch_operands = 0 : i64, tpu.core_type = #tpu.core_type<tc>, window_params = [{transform_indices = @transform_0, window_bounds = array<i64: 8, 256>}, {transform_indices = @transform_1, window_bounds = array<i64: 8, 1>}, {transform_indices = @transform_2, window_bounds = array<i64: 8, 1>}, {transform_indices = @transform_3, window_bounds = array<i64: 8, 256>}]} {
    %c0 = arith.constant 0 : index
    %c0_0 = arith.constant 0 : index
    %0 = vector.load %arg2[%c0, %c0_0] : memref<8x256xf32, #tpu.memory_space<vmem>>, vector<8x256xf32>
    %c0_1 = arith.constant 0 : index
    %c0_2 = arith.constant 0 : index
    %1 = vector.load %arg3[%c0_1, %c0_2] : memref<8x1xf32, #tpu.memory_space<vmem>>, vector<8x1xf32>
    %2 = vector.broadcast %1 : vector<8x1xf32> to vector<8x256xf32>
    %3 = arith.mulf %0, %2 : vector<8x256xf32>
    %c0_3 = arith.constant 0 : index
    %c0_4 = arith.constant 0 : index
    %4 = vector.load %arg4[%c0_3, %c0_4] : memref<8x1xf32, #tpu.memory_space<vmem>>, vector<8x1xf32>
    %5 = vector.broadcast %4 : vector<8x1xf32> to vector<8x256xf32>
    %6 = arith.addf %3, %5 : vector<8x256xf32>
    %c0_5 = arith.constant 0 : index
    %c0_6 = arith.constant 0 : index
    %7 = vector.load %arg5[%c0_5, %c0_6] : memref<8x256xf32, #tpu.memory_space<vmem>>, vector<8x256xf32>
    tpu.vector_store %arg5[%c0_5, %c0_6], %6 {strides = array<i32>} : memref<8x256xf32, #tpu.memory_space<vmem>>, vector<8x256xf32>,
    return
  }
  func.func @transform_0(%arg0: i32, %arg1: i32) -> (i32, i32) {
    %c0_i32 = arith.constant 0 : i32
    return %arg0, %arg1 : i32, i32
  }
  func.func @transform_1(%arg0: i32, %arg1: i32) -> (i32, i32) {
    %c0_i32 = arith.constant 0 : i32
    %c0_i32_0 = arith.constant 0 : i32
    return %arg0, %c0_i32 : i32, i32
  }
  func.func @transform_2(%arg0: i32, %arg1: i32) -> (i32, i32) {
    %c0_i32 = arith.constant 0 : i32
    %c0_i32_0 = arith.constant 0 : i32
    return %arg0, %c0_i32 : i32, i32
  }
  func.func @transform_3(%arg0: i32, %arg1: i32) -> (i32, i32) {
    %c0_i32 = arith.constant 0 : i32
    return %arg0, %arg1 : i32, i32
  }
}

</mosaic_0001>

<llo_original>
// kernel: tpu_custom_call.1
$region0: #{tpu_custom_call.1}
  #allocation0 [shape = 'u32[]', space=smem, size = 0x4, offset = 0x4, fixed_abs, tag = 'smem constant byte address 0x4 - core index']
  #allocation1 [shape = 'u32[144,128]{1,0:T(1,128)}', space=vmem, size = 0x12000, scoped, tag = 'internal scratch']
  %s0 = inlined_call_operand.vmem [shape: f32[8,256], index: 0, kind: input, shape index: {}]
  %s1 = inlined_call_operand.vmem [shape: f32[8,1], index: 1, kind: input, shape index: {}]
  %s2 = inlined_call_operand.vmem [shape: f32[8,1], index: 2, kind: input, shape index: {}]
  %s3 = inlined_call_operand.hbm [shape: f32[8,256], index: 3, kind: output, shape index: {}]
  %s4 = sld [smem:[#allocation0]]
  $region22: #{tpu_custom_call.1} parent=0
    _
  %s6 = ssub.s32 1, %s4
  %s7 = scalar_select 0, %s6, %s4
  $region1: #{tpu_custom_call.1} parent=0
    #allocation2 [shape = 'u8[8192]{0}', space=vmem, size = 0x2000, scoped, tag = 'output window, operand 0, single buffered']
    #allocation3 [shape = 's32[1]{0}', space=sflag, size = 0x4, scoped, tag = 'scoped memory for tpu_custom_call.1']
    %8 = vsyncpa [#allocation3], 0
    // Predicated region
    $region2: #{tpu_custom_call.1} parent=1 // pred_check
      _
    $region3: #{tpu_custom_call.1} parent=1 // pred_check_branch
      %10 = sbr.rel (0) target = $region5
    $region4: #{tpu_custom_call.1} parent=1 // pred_region
      _
    $region5: #{tpu_custom_call.1} parent=1 // pred_fallthru
      _
    // Predicated region
    $region6: #{tpu_custom_call.1} parent=1 // pred_check
      _
    $region7: #{tpu_custom_call.1} parent=1 // pred_check_branch
      %12 = sbr.rel (0) target = $region9
    $region8: #{tpu_custom_call.1} parent=1 // pred_region
      _
    $region9: #{tpu_custom_call.1} parent=1 // pred_fallthru
      _
    // Predicated region
    $region10: #{tpu_custom_call.1} parent=1 // pred_check
      _
    $region11: #{tpu_custom_call.1} parent=1 // pred_check_branch
      %14 = sbr.rel (0) target = $region13
    $region12: #{tpu_custom_call.1} parent=1 // pred_region
      _
    $region13: #{tpu_custom_call.1} parent=1 // pred_fallthru
      _
    %v15 = vld [vmem:[%s0] sm:$0xff]
    %v16 = vld [vmem:[%s0 + $0x8] sm:$0xff]
    %v17 = vld [vmem:[%s1] sm:$0xff]
    %19 = vset.pattern.permute.xlu0 0
    %20 = vperm.xlu0 %19, %v17
    %v21 = vpop.permute.xlu0 %20
    %v23 = vmul.f32 %v15, %v21
    %v24 = vmul.f32 %v16, %v21
    %v25 = vld [vmem:[%s2] sm:$0xff]
    %27 = vset.pattern.permute.xlu0 0
    %28 = vperm.xlu0 %27, %v25
    %v29 = vpop.permute.xlu0 %28
    %v31 = vadd.f32 %v23, %v29
    %v32 = vadd.f32 %v24, %v29
    %33 = vst [vmem:[#allocation2] sm:$0xff] %v31
    %34 = vst [vmem:[#allocation2 + $0x8] sm:$0xff] %v32
    // Predicated region
    $region14: #{tpu_custom_call.1} parent=1 // pred_check
      _
    $region15: #{tpu_custom_call.1} parent=1 // pred_check_branch
      %36 = sbr.rel (0) target = $region17
    $region16: #{tpu_custom_call.1} parent=1 // pred_region
      %s38 = ssub.s32 256, 256
      %39 = vsyncadd [#allocation3], %s38
      %s41 = sshll.u32 [#allocation2], 4
      %s42 = int_to_ptr.vmem [resolvable:$true] %s41
      %44 = dma.vmem_to_hbm [thread:$0]  %s42, 256, %s3, [#allocation3]
    $region17: #{tpu_custom_call.1} parent=1 // pred_fallthru
      _
    // Predicated region
    $region18: #{tpu_custom_call.1} parent=1 // pred_check
      _
    $region19: #{tpu_custom_call.1} parent=1 // pred_check_branch
      %46 = sbr.rel (0) target = $region21
    $region20: #{tpu_custom_call.1} parent=1 // pred_region
      %47 = dma.done [#allocation3], 256
    $region21: #{tpu_custom_call.1} parent=1 // pred_fallthru
      _
    %48 = vsyncpa [#allocation3], 1

</llo_original>
